<compile_context>
chip_gen: v5e
topology: v5e:2x2
jax: 0.10.0
libtpu: 0.0.40
codegen_flags: <defaults>
</compile_context>

<pallas_src>
import functools

import jax
import jax.numpy as jnp
from jax.experimental import pallas as pl
from jax.experimental.pallas import tpu as pltpu


def _jsd_kernel(x1_ref, x2_ref, out_ref, acc_ref, *, n_rows, tile_n, need_mask):
    """One (tile_n, C) slab of each logit tensor per grid step.

    acc_ref is a (tile_n, C) f32 VMEM scratch accumulating elementwise
    kl = p1 * (logp1 - logp2) across grid steps.  out_ref (1, 1) is written
    only on the last step with the full reduction.
    """
    i = pl.program_id(0)

    @pl.when(i == 0)
    def _():
        acc_ref[...] = jnp.zeros_like(acc_ref)

    x1 = x1_ref[...].astype(jnp.float32)
    x2 = x2_ref[...].astype(jnp.float32)

    if need_mask:
        # Rows past the true batch size (padded last block) must contribute 0.
        row = jax.lax.broadcasted_iota(jnp.int32, x1.shape, 0) + i * tile_n
        valid = row < n_rows
        x1 = jnp.where(valid, x1, 0.0)  # keep softmax of pad rows benign
        x2 = jnp.where(valid, x2, 0.0)

    # log-softmax along the class axis (axis=1 -> lanes), numerically stable.
    s1 = x1 - jnp.max(x1, axis=1, keepdims=True)
    e1 = jnp.exp(s1)
    sum1 = jnp.sum(e1, axis=1, keepdims=True)
    logp1 = s1 - jnp.log(sum1)
    p1 = e1 / sum1                     # softmax(net_1_logits), reuses e1/sum1

    s2 = x2 - jnp.max(x2, axis=1, keepdims=True)
    sum2 = jnp.sum(jnp.exp(s2), axis=1, keepdims=True)
    logp2 = s2 - jnp.log(sum2)

    # Reference: m = 0.5*(p1 + p1) = p1, so the first KL term is identically 0
    # and the total reduces to p1 * (logp1 - logp2).
    kl = p1 * (logp1 - logp2)
    if need_mask:
        kl = jnp.where(valid, kl, 0.0)

    acc_ref[...] += kl

    @pl.when(i == pl.num_programs(0) - 1)
    def _():
        out_ref[...] = jnp.sum(acc_ref[...], keepdims=True)


def jsd_pallas(net_1_logits, net_2_logits, tile_n=None,
               target_block_bytes=2 << 20):
    assert net_1_logits.shape == net_2_logits.shape
    assert net_1_logits.ndim == 2
    N, C = net_1_logits.shape

    # Pick the largest batch tile keeping each (tile_n, C) f32 block ~<= 2 MiB:
    # 2 inputs x 2 pipeline buffers x block + acc stays well under the scoped
    # VMEM default on every generation (16 MiB v5e / 32 MiB v6e, v7x).
    if tile_n is None:
        tile_n = max(8, (target_block_bytes // (C * 4)) // 8 * 8)
    if N < 8:
        tile_n = N                      # full-extent block, always legal
    else:
        tile_n = max(8, min(int(tile_n), (N // 8) * 8))

    grid = pl.cdiv(N, tile_n)
    need_mask = (N % tile_n) != 0

    # TODO(synk): for vocab-scale C, add a class-axis grid with an online
    # (flash-style) running max / log-sum-exp instead of one (tile_n, C) block.

    kernel = functools.partial(
        _jsd_kernel, n_rows=N, tile_n=tile_n, need_mask=need_mask)

    total = pl.pallas_call(
        kernel,
        out_shape=jax.ShapeDtypeStruct((1, 1), jnp.float32),
        grid_spec=pltpu.PrefetchScalarGridSpec(
            num_scalar_prefetch=0,
            grid=(grid,),
            in_specs=[
                pl.BlockSpec((tile_n, C), lambda i: (i, 0)),
                pl.BlockSpec((tile_n, C), lambda i: (i, 0)),
            ],
            out_specs=pl.BlockSpec((1, 1), lambda i: (0, 0)),
            scratch_shapes=[pltpu.VMEM((tile_n, C), jnp.float32)],
        ),
        compiler_params=pltpu.CompilerParams(
            dimension_semantics=("arbitrary",)),  # reduction over batch tiles
    )(net_1_logits, net_2_logits)

    # batchmean: each kl_div is divided by N (input.size(0)); then 0.5 * loss.
    return 0.5 * total[0, 0] / N


def jsd_reference(x1, x2):
    """Pure-JAX reference mirroring the PyTorch module line-by-line."""
    p1 = jax.nn.softmax(x1, axis=1)
    m = 0.5 * (p1 + p1)
    logp1 = jax.nn.log_softmax(x1, axis=1)
    logp2 = jax.nn.log_softmax(x2, axis=1)
    n = x1.shape[0]
    kl1 = jnp.sum(m * (jnp.log(m) - logp1)) / n
    kl2 = jnp.sum(m * (jnp.log(m) - logp2)) / n
    return 0.5 * (kl1 + kl2)


if __name__ == "__main__":
    key = jax.random.PRNGKey(0)
    k1, k2 = jax.random.split(key)
    N, C = 8, 128
    net_1_logits = jax.random.normal(k1, (N, C), dtype=jnp.float32)
    net_2_logits = jax.random.normal(k2, (N, C), dtype=jnp.float32)

    out = jsd_pallas(net_1_logits, net_2_logits)
    out = jax.block_until_ready(out)

    ref = jsd_reference(net_1_logits, net_2_logits)
    assert jnp.allclose(out, ref, rtol=1e-5, atol=1e-6), (out, ref)

    print("KERNEL_OK")
</pallas_src>

<mosaic_0001>
module attributes {stable_mosaic.version = 11 : i64} {
  func.func @_jsd_kernel(%arg0: i32, %arg1: memref<8x128xf32, #tpu.memory_space<vmem>>, %arg2: memref<8x128xf32, #tpu.memory_space<vmem>>, %arg3: memref<1x1xf32, #tpu.memory_space<vmem>>, %arg4: memref<8x128xf32, #tpu.memory_space<vmem>>) attributes {dimension_semantics = [#tpu.dimension_semantics<arbitrary>], iteration_bounds = array<i64: 1>, scalar_prefetch = 0 : i64, scratch_operands = 1 : i64, tpu.core_type = #tpu.core_type<tc>, window_params = [{transform_indices = @transform_0, window_bounds = array<i64: 8, 128>}, {transform_indices = @transform_1, window_bounds = array<i64: 8, 128>}, {pipeline_mode = #tpu.pipeline_mode<synchronous>, transform_indices = @transform_2, window_bounds = array<i64: 1, 1>}]} {
    %c0_i32 = arith.constant 0 : i32
    %0 = arith.cmpi eq, %arg0, %c0_i32 : i32
    %1 = arith.extui %0 : i1 to i32
    %c0_i32_0 = arith.constant 0 : i32
    %2 = arith.cmpi ne, %1, %c0_i32_0 : i32
    scf.if %2 {
      %cst_13 = arith.constant 0.000000e+00 : f32
      %35 = vector.broadcast %cst_13 : f32 to vector<8x128xf32>
      %c0_14 = arith.constant 0 : index
      %c0_15 = arith.constant 0 : index
      %36 = vector.load %arg4[%c0_14, %c0_15] : memref<8x128xf32, #tpu.memory_space<vmem>>, vector<8x128xf32>
      tpu.vector_store %arg4[%c0_14, %c0_15], %35 {strides = array<i32>} : memref<8x128xf32, #tpu.memory_space<vmem>>, vector<8x128xf32>,
    } else {
    }
    %c0 = arith.constant 0 : index
    %c0_1 = arith.constant 0 : index
    %3 = vector.load %arg1[%c0, %c0_1] : memref<8x128xf32, #tpu.memory_space<vmem>>, vector<8x128xf32>
    %c0_2 = arith.constant 0 : index
    %c0_3 = arith.constant 0 : index
    %4 = vector.load %arg2[%c0_2, %c0_3] : memref<8x128xf32, #tpu.memory_space<vmem>>, vector<8x128xf32>
    %cst = arith.constant dense<0xFF800000> : vector<8xf32>
    %5 = vector.multi_reduction <maximumf>, %3, %cst [1] : vector<8x128xf32> to vector<8xf32>
    %6 = vector.shape_cast %5 : vector<8xf32> to vector<8x1xf32>
    %7 = vector.broadcast %6 : vector<8x1xf32> to vector<8x128xf32>
    %8 = arith.subf %3, %7 : vector<8x128xf32>
    %9 = math.exp %8 : vector<8x128xf32>
    %cst_4 = arith.constant dense<0.000000e+00> : vector<8xf32>
    %10 = vector.multi_reduction <add>, %9, %cst_4 [1] : vector<8x128xf32> to vector<8xf32>
    %11 = vector.shape_cast %10 : vector<8xf32> to vector<8x1xf32>
    %12 = math.log %11 : vector<8x1xf32>
    %13 = vector.broadcast %12 : vector<8x1xf32> to vector<8x128xf32>
    %14 = arith.subf %8, %13 : vector<8x128xf32>
    %15 = vector.broadcast %11 : vector<8x1xf32> to vector<8x128xf32>
    %16 = arith.divf %9, %15 : vector<8x128xf32>
    %cst_5 = arith.constant dense<0xFF800000> : vector<8xf32>
    %17 = vector.multi_reduction <maximumf>, %4, %cst_5 [1] : vector<8x128xf32> to vector<8xf32>
    %18 = vector.shape_cast %17 : vector<8xf32> to vector<8x1xf32>
    %19 = vector.broadcast %18 : vector<8x1xf32> to vector<8x128xf32>
    %20 = arith.subf %4, %19 : vector<8x128xf32>
    %21 = math.exp %20 : vector<8x128xf32>
    %cst_6 = arith.constant dense<0.000000e+00> : vector<8xf32>
    %22 = vector.multi_reduction <add>, %21, %cst_6 [1] : vector<8x128xf32> to vector<8xf32>
    %23 = vector.shape_cast %22 : vector<8xf32> to vector<8x1xf32>
    %24 = math.log %23 : vector<8x1xf32>
    %25 = vector.broadcast %24 : vector<8x1xf32> to vector<8x128xf32>
    %26 = arith.subf %20, %25 : vector<8x128xf32>
    %27 = arith.subf %14, %26 : vector<8x128xf32>
    %28 = arith.mulf %16, %27 : vector<8x128xf32>
    %c0_7 = arith.constant 0 : index
    %c0_8 = arith.constant 0 : index
    %29 = vector.load %arg4[%c0_7, %c0_8] : memref<8x128xf32, #tpu.memory_space<vmem>>, vector<8x128xf32>
    %30 = arith.addf %29, %28 : vector<8x128xf32>
    %c0_9 = arith.constant 0 : index
    %c0_10 = arith.constant 0 : index
    %31 = vector.load %arg4[%c0_9, %c0_10] : memref<8x128xf32, #tpu.memory_space<vmem>>, vector<8x128xf32>
    tpu.vector_store %arg4[%c0_9, %c0_10], %30 {strides = array<i32>} : memref<8x128xf32, #tpu.memory_space<vmem>>, vector<8x128xf32>,
    %c0_i32_11 = arith.constant 0 : i32
    %32 = arith.cmpi eq, %arg0, %c0_i32_11 : i32
    %33 = arith.extui %32 : i1 to i32
    %c0_i32_12 = arith.constant 0 : i32
    %34 = arith.cmpi ne, %33, %c0_i32_12 : i32
    scf.if %34 {
      %c0_13 = arith.constant 0 : index
      %c0_14 = arith.constant 0 : index
      %35 = vector.load %arg4[%c0_13, %c0_14] : memref<8x128xf32, #tpu.memory_space<vmem>>, vector<8x128xf32>
      %36 = vector.shape_cast %35 : vector<8x128xf32> to vector<1x8x128xf32>
      %cst_15 = arith.constant dense<0.000000e+00> : vector<1xf32>
      %37 = vector.multi_reduction <add>, %36, %cst_15 [1, 2] : vector<1x8x128xf32> to vector<1xf32>
      %38 = vector.shape_cast %37 : vector<1xf32> to vector<1x1x1xf32>
      %39 = vector.extract %38[0, 0, 0] : f32 from vector<1x1x1xf32>
      %40 = vector.broadcast %39 : f32 to vector<1x1xf32>
      %c0_16 = arith.constant 0 : index
      %c0_17 = arith.constant 0 : index
      %41 = vector.load %arg3[%c0_16, %c0_17] : memref<1x1xf32, #tpu.memory_space<vmem>>, vector<1x1xf32>
      tpu.vector_store %arg3[%c0_16, %c0_17], %40 {strides = array<i32>} : memref<1x1xf32, #tpu.memory_space<vmem>>, vector<1x1xf32>,
    } else {
    }
    return
  }
  func.func @transform_0(%arg0: i32) -> (i32, i32) {
    %c0_i32 = arith.constant 0 : i32
    %c0_i32_0 = arith.constant 0 : i32
    return %arg0, %c0_i32 : i32, i32
  }
  func.func @transform_1(%arg0: i32) -> (i32, i32) {
    %c0_i32 = arith.constant 0 : i32
    %c0_i32_0 = arith.constant 0 : i32
    return %arg0, %c0_i32 : i32, i32
  }
  func.func @transform_2(%arg0: i32) -> (i32, i32) {
    %c0_i32 = arith.constant 0 : i32
    %c0_i32_0 = arith.constant 0 : i32
    %c0_i32_1 = arith.constant 0 : i32
    return %c0_i32, %c0_i32_0 : i32, i32
  }
}

</mosaic_0001>

<llo_original>
// kernel: tpu_custom_call.1
$region0: #{tpu_custom_call.1}
  #allocation0 [shape = 'u32[]', space=smem, size = 0x4, offset = 0x4, fixed_abs, tag = 'smem constant byte address 0x4 - core index']
  #allocation1 [shape = 'u32[72,128]{1,0:T(1,128)}', space=vmem, size = 0x9000, scoped, tag = 'internal scratch']
  #allocation2 [shape = 'f32[8,128]{1,0:T(8,128)}', space=vmem, size = 0x1000, scoped, tag = 'scratch operand']
  %s0 = inlined_call_operand.hbm [shape: f32[8,128], index: 0, kind: input, shape index: {}]
  %s1 = inlined_call_operand.hbm [shape: f32[8,128], index: 1, kind: input, shape index: {}]
  %s2 = inlined_call_operand.hbm [shape: f32[1,1], index: 2, kind: output, shape index: {}]
  %s3 = sld [smem:[#allocation0]]
  $region34: #{tpu_custom_call.1} parent=0
    _
  %s5 = ssub.s32 1, %s3
  %s6 = scalar_select 0, %s5, %s3
  $region1: #{tpu_custom_call.1} parent=0
    #allocation3 [shape = 'u8[4096]{0}', space=vmem, size = 0x1000, scoped, tag = 'input window, operand 0, single buffered']
    #allocation4 [shape = 's32[1]{0}', space=sflag, size = 0x4, scoped, tag = 'scoped memory for tpu_custom_call.1']
    #allocation5 [shape = 's32[1]{0}', space=sflag, size = 0x4, scoped, tag = 'scoped memory for tpu_custom_call.1']
    #allocation6 [shape = 'u8[4096]{0}', space=vmem, size = 0x1000, scoped, tag = 'input window, operand 1, single buffered']
    #allocation7 [shape = 's32[1]{0}', space=sflag, size = 0x4, scoped, tag = 'scoped memory for tpu_custom_call.1']
    #allocation8 [shape = 'u8[512]{0}', space=vmem, size = 0x400, scoped, tag = 'output window, operand 0, single buffered']
    %7 = vsyncpa [#allocation4], 0
    %8 = vsyncpa [#allocation7], 0
    %9 = vsyncpa [#allocation5], 0
    // Predicated region
    $region2: #{tpu_custom_call.1} parent=1 // pred_check
      _
    $region3: #{tpu_custom_call.1} parent=1 // pred_check_branch
      %11 = sbr.rel (0) target = $region5
    $region4: #{tpu_custom_call.1} parent=1 // pred_region
      %13 = vsyncadd [#allocation4], 0
      %s15 = sshll.u32 %s0, 4
      %s16 = int_to_ptr.hbm [resolvable:$true] %s15
      %s17 = sshll.u32 [#allocation3], 4
      %s18 = int_to_ptr.vmem [resolvable:$true] %s17
      %20 = dma.hbm_to_vmem [thread:$0]  %s16, 128, %s18, [#allocation4]
    $region5: #{tpu_custom_call.1} parent=1 // pred_fallthru
      _
    // Predicated region
    $region6: #{tpu_custom_call.1} parent=1 // pred_check
      _
    $region7: #{tpu_custom_call.1} parent=1 // pred_check_branch
      %22 = sbr.rel (0) target = $region9
    $region8: #{tpu_custom_call.1} parent=1 // pred_region
      %24 = vsyncadd [#allocation7], 0
      %s26 = sshll.u32 %s1, 4
      %s27 = int_to_ptr.hbm [resolvable:$true] %s26
      %s28 = sshll.u32 [#allocation6], 4
      %s29 = int_to_ptr.vmem [resolvable:$true] %s28
      %31 = dma.hbm_to_vmem [thread:$0]  %s27, 128, %s29, [#allocation7]
    $region9: #{tpu_custom_call.1} parent=1 // pred_fallthru
      _
    // Predicated region
    $region10: #{tpu_custom_call.1} parent=1 // pred_check
      _
    $region11: #{tpu_custom_call.1} parent=1 // pred_check_branch
      %33 = sbr.rel (0) target = $region13
    $region12: #{tpu_custom_call.1} parent=1 // pred_region
      %35 = dma.done [#allocation4], 128
    $region13: #{tpu_custom_call.1} parent=1 // pred_fallthru
      _
    // Predicated region
    $region14: #{tpu_custom_call.1} parent=1 // pred_check
      _
    $region15: #{tpu_custom_call.1} parent=1 // pred_check_branch
      %37 = sbr.rel (0) target = $region17
    $region16: #{tpu_custom_call.1} parent=1 // pred_region
      %39 = dma.done [#allocation7], 128
    $region17: #{tpu_custom_call.1} parent=1 // pred_fallthru
      _
    %p40 = scmp.eq.s32.totalorder 0, 0
    // Predicated region
    $region18: #{tpu_custom_call.1} parent=1 // pred_check
      %p41 = pneg %p40
    $region19: #{tpu_custom_call.1} parent=1 // pred_check_branch
      %43 = sbr.rel (%p41) target = $region21
    $region20: #{tpu_custom_call.1} parent=1 // pred_region
      %44 = vst [vmem:[#allocation2] sm:$0xff] 0.0
    $region21: #{tpu_custom_call.1} parent=1 // pred_fallthru
      _
    %v45 = vld [vmem:[#allocation3] sm:$0xff]
    %v46 = vld [vmem:[#allocation6] sm:$0xff]
    %47 = vmax.xlane.f32.xlu0 %v45
    %v48 = vpop.xlane.xlu0 %47
    %v49 = vsub.f32 %v45, %v48
    %v50 = vmul.f32 %v49, 1.442695
    %v51 = vpow.pop %v50
    %52 = vadd.xlane.f32.xlu0 %v51
    %v53 = vpop.xlane.xlu0 %52
    %v54 = vlog2.pop %v53
    %v55 = vmul.f32 %v54, 0.6931472
    %v56 = vsub.f32 %v49, %v55
    %v57 = vrcp.pop %v53
    %v58 = vmul.f32 %v53, %v57
    %v59 = vsub.f32 1.0, %v58
    %v60 = vmul.f32 %v57, %v59
    %v61 = vadd.f32 %v57, %v60
    %vm62 = vweird.f32 %v53
    %vm63 = vweird.f32 %v57
    %vm64 = vmor %vm62, %vm63
    %v65 = vsel %vm64, %v57, %v61
    %v66 = vand.u32 2147483647, %v53
    %vm67 = vcmp.eq.f32.partialorder %v66, 8.507059e+37
    %v68 = vand.u32 %v53, 2147483648
    %v69 = vor.u32 1.1754944e-38, %v68
    %v70 = vsel %vm67, %v69, %v65
    %v71 = vmul.f32 %v51, %v70
    %72 = vmax.xlane.f32.xlu0 %v46
    %v73 = vpop.xlane.xlu0 %72
    %v74 = vsub.f32 %v46, %v73
    %v75 = vmul.f32 %v74, 1.442695
    %v76 = vpow.pop %v75
    %77 = vadd.xlane.f32.xlu0 %v76
    %v78 = vpop.xlane.xlu0 %77
    %v79 = vlog2.pop %v78
    %v80 = vmul.f32 %v79, 0.6931472
    %v81 = vsub.f32 %v74, %v80
    %v82 = vsub.f32 %v56, %v81
    %v83 = vmul.f32 %v71, %v82
    %v84 = vld [vmem:[#allocation2] sm:$0xff]
    %v85 = vadd.f32 %v84, %v83
    %86 = vst [vmem:[#allocation2] sm:$0xff] %v85
    // Predicated region
    $region22: #{tpu_custom_call.1} parent=1 // pred_check
      %p87 = pneg %p40
    $region23: #{tpu_custom_call.1} parent=1 // pred_check_branch
      %89 = sbr.rel (%p87) target = $region25
    $region24: #{tpu_custom_call.1} parent=1 // pred_region
      %v90 = vld [vmem:[#allocation2] sm:$0xff]
      %91 = vadd.xlane.f32.xlu0 %v90
      %v92 = vpop.xlane.xlu0 %91
      %v93 = vrot.slane %v92, 4
      %v94 = vadd.f32 %v92, %v93
      %v95 = vrot.slane %v94, 2
      %v96 = vadd.f32 %v94, %v95
      %v97 = vrot.slane %v96, 1
      %v98 = vadd.f32 %v96, %v97
      %s99 = vtos %v98
      %v100 = vstv %s99
      %vm101 = vcmask 0
      %102 = vst.msk [vmem:[#allocation8] sm:$0x1] %vm101, %v100
    $region25: #{tpu_custom_call.1} parent=1 // pred_fallthru
      _
    // Predicated region
    $region26: #{tpu_custom_call.1} parent=1 // pred_check
      _
    $region27: #{tpu_custom_call.1} parent=1 // pred_check_branch
      %104 = sbr.rel (0) target = $region29
    $region28: #{tpu_custom_call.1} parent=1 // pred_region
      %106 = vsyncadd [#allocation5], 0
      %s108 = sshll.u32 [#allocation8], 4
      %s109 = int_to_ptr.vmem [resolvable:$true] %s108
      %s110 = sshll.u32 %s2, 4
      %s111 = int_to_ptr.hbm [resolvable:$true] %s110
      %113 = dma.vmem_to_hbm [thread:$0]  %s109, 16, %s111, [#allocation5]
    $region29: #{tpu_custom_call.1} parent=1 // pred_fallthru
      _
    // Predicated region
    $region30: #{tpu_custom_call.1} parent=1 // pred_check
      _
    $region31: #{tpu_custom_call.1} parent=1 // pred_check_branch
      %115 = sbr.rel (0) target = $region33
    $region32: #{tpu_custom_call.1} parent=1 // pred_region
      %117 = dma.done [#allocation5], 16
    $region33: #{tpu_custom_call.1} parent=1 // pred_fallthru
      _
    %118 = vsyncpa [#allocation4], 1
    %119 = vsyncpa [#allocation7], 1
    %120 = vsyncpa [#allocation5], 1

</llo_original>
